<compile_context>
chip_gen: v7x
topology: tpu7x:2x2x1
jax: 0.10.0
libtpu: 0.0.40
codegen_flags: <defaults>
</compile_context>

<pallas_src>
import functools

import jax
import jax.numpy as jnp
from jax.experimental import pallas as pl
from jax.experimental.pallas import tpu as pltpu


def _round_up(x, m):
    return ((x + m - 1) // m) * m


def _mlp_critic_kernel(obs_ref,
                       w0_ref, b0_ref,
                       w1_ref, b1_ref,
                       w2_ref, b2_ref,
                       out_ref, *, bf16_tanh):
    """Fused critic forward on one lane-packed batch tile.

    obs_ref : (TILE_BP, P*obs_dim)   P samples packed per 128-lane row
    w0_ref  : (P*obs_dim, P*H0)  block-diag     b0_ref : (1, P*H0)
    w1_ref  : (P*H0,      P*H1)  block-diag     b1_ref : (1, P*H1)
    w2_ref  : (P*H1, P)          block columns  b2_ref : (1, P)
    out_ref : (TILE_BP, P)       out[r, s] = value of sample P*r + s
    """
    x = obs_ref[...].astype(jnp.float32)   # obs.float()

    def act(pre):
        if bf16_tanh:
            # v6e/v7x only: bf16 EUP roughly doubles tanh throughput; matmul
            # accumulation stays f32.  Slight deviation from torch f32 math.
            return jnp.tanh(pre.astype(jnp.bfloat16)).astype(jnp.float32)
        return jnp.tanh(pre)

    h = act(jnp.dot(x, w0_ref[...], preferred_element_type=jnp.float32) + b0_ref[...])
    h = act(jnp.dot(h, w1_ref[...], preferred_element_type=jnp.float32) + b1_ref[...])

    # Final Linear(H1, 1) for all P packed samples at once:
    # (TILE_BP, P*H1) @ (P*H1, P).  N=P is a skinny MXU pass, but the MXU is
    # nowhere near the bottleneck (EUP/tanh is).
    v = jnp.dot(h, w2_ref[...], preferred_element_type=jnp.float32) + b2_ref[...]
    out_ref[...] = v.astype(out_ref.dtype)


@functools.partial(jax.jit,
                   static_argnames=("tile_b", "vmem_budget_bytes", "bf16_tanh"))
def mlp_critic_forward(obs, params, *, tile_b=None,
                       vmem_budget_bytes=10 * 1024 * 1024, bf16_tanh=False):
    """torch.squeeze(v_net(obs.float()), -1) via a lane-packed Pallas kernel."""
    (w0, b0), (w1, b1), (w2_row, b2) = params
    B, obs_dim = obs.shape
    h0 = w0.shape[1]
    h1 = w1.shape[1]

    # ---- lane packing factor: P samples per 128-lane row --------------------
    pack = max(1, 128 // max(obs_dim, h0, h1))

    b_pad = _round_up(B, pack)
    if b_pad != B:
        # Pads by < pack rows only (needed for the packed reshape); the batch
        # tiling itself never pads (cdiv grid + masked edge writeback).
        obs = jnp.pad(obs, ((0, b_pad - B), (0, 0)))
    bp = b_pad // pack

    obs_w, hid_w, out_w = pack * obs_dim, pack * max(h0, h1), pack
    obs_p = obs.reshape(bp, obs_w)   # packed row r = samples [P*r .. P*r+P-1]

    # ---- block-diagonal packed parameters (tiny arrays, built per call) -----
    eye = jnp.eye(pack, dtype=jnp.float32)
    w0_bd = jnp.kron(eye, w0.astype(jnp.float32))          # (P*obs_dim, P*H0)
    w1_bd = jnp.kron(eye, w1.astype(jnp.float32))          # (P*H0,      P*H1)
    w2_bk = jnp.kron(eye, w2_row.astype(jnp.float32).T)    # (P*H1,      P)
    b0_t = jnp.tile(b0.astype(jnp.float32), (1, pack))
    b1_t = jnp.tile(b1.astype(jnp.float32), (1, pack))
    b2_t = jnp.tile(b2.astype(jnp.float32), (1, pack))

    # ---- batch tile (in packed rows), sized from a VMEM budget --------------
    if tile_b is None:
        # Double-buffered obs + out tiles plus ~2 f32 temporaries of the
        # widest hidden layer per row.
        bytes_per_row = 4 * (2 * obs_w + 2 * hid_w + 2 * out_w)
        tile_bp = max(8, (vmem_budget_bytes // bytes_per_row) // 8 * 8)
        if bp > 8:
            # Prefer >=2 grid steps so both v7x TensorCores get a batch shard.
            tile_bp = min(tile_bp, _round_up(pl.cdiv(bp, 2), 8))
    else:
        tile_bp = max(8, _round_up(int(tile_b), 8 * pack) // pack)
    tile_bp = bp if bp < 8 else min(tile_bp, _round_up(bp, 8))

    grid = (pl.cdiv(bp, tile_bp),)
    const = lambda i: (0, 0)   # weights/biases stay VMEM-resident across steps

    out = pl.pallas_call(
        functools.partial(_mlp_critic_kernel, bf16_tanh=bf16_tanh),
        out_shape=jax.ShapeDtypeStruct((bp, pack), jnp.float32),
        grid=grid,
        in_specs=[
            pl.BlockSpec((tile_bp, obs_w), lambda i: (i, 0)),   # streamed obs
            pl.BlockSpec(w0_bd.shape, const),
            pl.BlockSpec(b0_t.shape, const),
            pl.BlockSpec(w1_bd.shape, const),
            pl.BlockSpec(b1_t.shape, const),
            pl.BlockSpec(w2_bk.shape, const),
            pl.BlockSpec(b2_t.shape, const),
        ],
        out_specs=pl.BlockSpec((tile_bp, pack), lambda i: (i, 0)),
        # TODO(synk): if v7x profiling shows one TensorCore idle under
        # "parallel", switch to pltpu.CORE_PARALLEL / an explicit core axis.
        compiler_params=pltpu.CompilerParams(
            dimension_semantics=("parallel",)),
    )(obs_p, w0_bd, b0_t, w1_bd, b1_t, w2_bk, b2_t)

    # un-pack + squeeze(-1) + drop the pack padding
    return out.reshape(bp * pack)[:B]


def init_linear(key, fan_in, fan_out):
    """PyTorch-style nn.Linear init: U(-1/sqrt(fan_in), 1/sqrt(fan_in)).

    Weight stored as (fan_in, fan_out) so the kernel computes x @ W + b."""
    kw, kb = jax.random.split(key)
    bound = 1.0 / jnp.sqrt(jnp.float32(fan_in))
    w = jax.random.uniform(kw, (fan_in, fan_out), jnp.float32, -bound, bound)
    b = jax.random.uniform(kb, (1, fan_out), jnp.float32, -bound, bound)
    return w, b


def init_final_linear(key, fan_in):
    """Final Linear(fan_in, 1): weight kept as a (1, fan_in) row (torch layout)."""
    kw, kb = jax.random.split(key)
    bound = 1.0 / jnp.sqrt(jnp.float32(fan_in))
    w_row = jax.random.uniform(kw, (1, fan_in), jnp.float32, -bound, bound)
    b = jax.random.uniform(kb, (1, 1), jnp.float32, -bound, bound)
    return w_row, b


def _reference(x, params):
    (w0, b0), (w1, b1), (w2_row, b2) = params
    h = jnp.tanh(x @ w0 + b0)
    h = jnp.tanh(h @ w1 + b1)
    return jnp.squeeze(h @ w2_row.T + b2, axis=-1)


if __name__ == "__main__":
    # observation_space ~ {"pos": (4, 4), "vel": (16,)}  ->  obs_dim = 16 + 16 = 32
    obs_dim = 32
    hidden_sizes = (32, 32)

    key = jax.random.PRNGKey(0)
    k_a, k_b, k_c, k0, k1, k2 = jax.random.split(key, 6)

    params = (
        init_linear(k0, obs_dim, hidden_sizes[0]),
        init_linear(k1, hidden_sizes[0], hidden_sizes[1]),
        init_final_linear(k2, hidden_sizes[1]),
    )

    # Small batch -> single packed block (bp = 2 packed rows).
    obs = jax.random.normal(k_a, (8, obs_dim), jnp.float32)
    v = mlp_critic_forward(obs, params)
    jax.block_until_ready(v)
    assert v.shape == (8,), v.shape
    assert jnp.allclose(v, _reference(obs, params), atol=1e-5, rtol=1e-5)

    # Multi-step grid + partial (masked) last block: bp=132, tile_bp=32 -> 5 steps.
    obs2 = jax.random.normal(k_b, (528, obs_dim), jnp.float32)
    v2 = mlp_critic_forward(obs2, params, tile_b=128)
    jax.block_until_ready(v2)
    assert v2.shape == (528,), v2.shape
    assert jnp.allclose(v2, _reference(obs2, params), atol=1e-5, rtol=1e-5)

    # Batch not a multiple of the pack factor (exercises the tiny pack pad).
    obs3 = jax.random.normal(k_c, (21, obs_dim), jnp.float32)
    v3 = mlp_critic_forward(obs3, params)
    jax.block_until_ready(v3)
    assert v3.shape == (21,), v3.shape
    assert jnp.allclose(v3, _reference(obs3, params), atol=1e-5, rtol=1e-5)

    # Optional bf16-tanh fast path (v6e/v7x); loose sanity check, off by default.
    v4 = mlp_critic_forward(obs2, params, tile_b=128, bf16_tanh=True)
    jax.block_until_ready(v4)
    assert v4.shape == (528,)
    assert jnp.allclose(v4, _reference(obs2, params), atol=0.5, rtol=0.0)

    print("KERNEL_OK")
</pallas_src>

<mosaic_0001>
module attributes {stable_mosaic.version = 11 : i64} {
  func.func @_mlp_critic_kernel(%arg0: i32, %arg1: memref<2x128xf32, #tpu.memory_space<vmem>>, %arg2: memref<128x128xf32, #tpu.memory_space<vmem>>, %arg3: memref<1x128xf32, #tpu.memory_space<vmem>>, %arg4: memref<128x128xf32, #tpu.memory_space<vmem>>, %arg5: memref<1x128xf32, #tpu.memory_space<vmem>>, %arg6: memref<128x4xf32, #tpu.memory_space<vmem>>, %arg7: memref<1x4xf32, #tpu.memory_space<vmem>>, %arg8: memref<2x4xf32, #tpu.memory_space<vmem>>) attributes {dimension_semantics = [#tpu.dimension_semantics<parallel>], iteration_bounds = array<i64: 1>, scalar_prefetch = 0 : i64, scratch_operands = 0 : i64, tpu.core_type = #tpu.core_type<tc>, window_params = [{transform_indices = @transform_0, window_bounds = array<i64: 2, 128>}, {pipeline_mode = #tpu.pipeline_mode<synchronous>, transform_indices = @transform_1, window_bounds = array<i64: 128, 128>}, {pipeline_mode = #tpu.pipeline_mode<synchronous>, transform_indices = @transform_2, window_bounds = array<i64: 1, 128>}, {pipeline_mode = #tpu.pipeline_mode<synchronous>, transform_indices = @transform_3, window_bounds = array<i64: 128, 128>}, {pipeline_mode = #tpu.pipeline_mode<synchronous>, transform_indices = @transform_4, window_bounds = array<i64: 1, 128>}, {pipeline_mode = #tpu.pipeline_mode<synchronous>, transform_indices = @transform_5, window_bounds = array<i64: 128, 4>}, {pipeline_mode = #tpu.pipeline_mode<synchronous>, transform_indices = @transform_6, window_bounds = array<i64: 1, 4>}, {transform_indices = @transform_7, window_bounds = array<i64: 2, 4>}]} {
    %c0 = arith.constant 0 : index
    %c0_0 = arith.constant 0 : index
    %0 = vector.load %arg1[%c0, %c0_0] : memref<2x128xf32, #tpu.memory_space<vmem>>, vector<2x128xf32>
    %c0_1 = arith.constant 0 : index
    %c0_2 = arith.constant 0 : index
    %1 = vector.load %arg2[%c0_1, %c0_2] : memref<128x128xf32, #tpu.memory_space<vmem>>, vector<128x128xf32>
    %cst = arith.constant dense<0.000000e+00> : vector<2x128xf32>
    %2 = tpu.matmul %0, %1, %cst {dimension_numbers = #tpu.dot_dimension_numbers<[1], [0], [0], [1], [0, 0, 1, 1], [], []>} : vector<2x128xf32>, vector<128x128xf32>, vector<2x128xf32> -> vector<2x128xf32>
    %c0_3 = arith.constant 0 : index
    %c0_4 = arith.constant 0 : index
    %3 = vector.load %arg3[%c0_3, %c0_4] : memref<1x128xf32, #tpu.memory_space<vmem>>, vector<1x128xf32>
    %4 = vector.broadcast %3 : vector<1x128xf32> to vector<2x128xf32>
    %5 = arith.addf %2, %4 : vector<2x128xf32>
    %6 = math.tanh %5 : vector<2x128xf32>
    %c0_5 = arith.constant 0 : index
    %c0_6 = arith.constant 0 : index
    %7 = vector.load %arg4[%c0_5, %c0_6] : memref<128x128xf32, #tpu.memory_space<vmem>>, vector<128x128xf32>
    %cst_7 = arith.constant dense<0.000000e+00> : vector<2x128xf32>
    %8 = tpu.matmul %6, %7, %cst_7 {dimension_numbers = #tpu.dot_dimension_numbers<[1], [0], [0], [1], [0, 0, 1, 1], [], []>} : vector<2x128xf32>, vector<128x128xf32>, vector<2x128xf32> -> vector<2x128xf32>
    %c0_8 = arith.constant 0 : index
    %c0_9 = arith.constant 0 : index
    %9 = vector.load %arg5[%c0_8, %c0_9] : memref<1x128xf32, #tpu.memory_space<vmem>>, vector<1x128xf32>
    %10 = vector.broadcast %9 : vector<1x128xf32> to vector<2x128xf32>
    %11 = arith.addf %8, %10 : vector<2x128xf32>
    %12 = math.tanh %11 : vector<2x128xf32>
    %c0_10 = arith.constant 0 : index
    %c0_11 = arith.constant 0 : index
    %13 = vector.load %arg6[%c0_10, %c0_11] : memref<128x4xf32, #tpu.memory_space<vmem>>, vector<128x4xf32>
    %cst_12 = arith.constant dense<0.000000e+00> : vector<2x4xf32>
    %14 = tpu.matmul %12, %13, %cst_12 {dimension_numbers = #tpu.dot_dimension_numbers<[1], [0], [0], [1], [0, 0, 1, 1], [], []>} : vector<2x128xf32>, vector<128x4xf32>, vector<2x4xf32> -> vector<2x4xf32>
    %c0_13 = arith.constant 0 : index
    %c0_14 = arith.constant 0 : index
    %15 = vector.load %arg7[%c0_13, %c0_14] : memref<1x4xf32, #tpu.memory_space<vmem>>, vector<1x4xf32>
    %16 = vector.broadcast %15 : vector<1x4xf32> to vector<2x4xf32>
    %17 = arith.addf %14, %16 : vector<2x4xf32>
    %c0_15 = arith.constant 0 : index
    %c0_16 = arith.constant 0 : index
    %18 = vector.load %arg8[%c0_15, %c0_16] : memref<2x4xf32, #tpu.memory_space<vmem>>, vector<2x4xf32>
    tpu.vector_store %arg8[%c0_15, %c0_16], %17 {strides = array<i32>} : memref<2x4xf32, #tpu.memory_space<vmem>>, vector<2x4xf32>,
    return
  }
  func.func @transform_0(%arg0: i32) -> (i32, i32) {
    %c0_i32 = arith.constant 0 : i32
    %c0_i32_0 = arith.constant 0 : i32
    return %arg0, %c0_i32 : i32, i32
  }
  func.func @transform_1(%arg0: i32) -> (i32, i32) {
    %c0_i32 = arith.constant 0 : i32
    %c0_i32_0 = arith.constant 0 : i32
    %c0_i32_1 = arith.constant 0 : i32
    return %c0_i32, %c0_i32_0 : i32, i32
  }
  func.func @transform_2(%arg0: i32) -> (i32, i32) {
    %c0_i32 = arith.constant 0 : i32
    %c0_i32_0 = arith.constant 0 : i32
    %c0_i32_1 = arith.constant 0 : i32
    return %c0_i32, %c0_i32_0 : i32, i32
  }
  func.func @transform_3(%arg0: i32) -> (i32, i32) {
    %c0_i32 = arith.constant 0 : i32
    %c0_i32_0 = arith.constant 0 : i32
    %c0_i32_1 = arith.constant 0 : i32
    return %c0_i32, %c0_i32_0 : i32, i32
  }
  func.func @transform_4(%arg0: i32) -> (i32, i32) {
    %c0_i32 = arith.constant 0 : i32
    %c0_i32_0 = arith.constant 0 : i32
    %c0_i32_1 = arith.constant 0 : i32
    return %c0_i32, %c0_i32_0 : i32, i32
  }
  func.func @transform_5(%arg0: i32) -> (i32, i32) {
    %c0_i32 = arith.constant 0 : i32
    %c0_i32_0 = arith.constant 0 : i32
    %c0_i32_1 = arith.constant 0 : i32
    return %c0_i32, %c0_i32_0 : i32, i32
  }
  func.func @transform_6(%arg0: i32) -> (i32, i32) {
    %c0_i32 = arith.constant 0 : i32
    %c0_i32_0 = arith.constant 0 : i32
    %c0_i32_1 = arith.constant 0 : i32
    return %c0_i32, %c0_i32_0 : i32, i32
  }
  func.func @transform_7(%arg0: i32) -> (i32, i32) {
    %c0_i32 = arith.constant 0 : i32
    %c0_i32_0 = arith.constant 0 : i32
    return %arg0, %c0_i32 : i32, i32
  }
}

</mosaic_0001>

<llo_original>
// kernel: mlp_critic_forward.1
$region0: #{mlp_critic_forward.1}
  #allocation0 [shape = 'u32[]', space=smem, size = 0x4, offset = 0x4, fixed_abs, tag = 'smem constant byte address 0x4 - core index']
  #allocation1 [shape = 'u32[144,128]{1,0:T(1,128)}', space=vmem, size = 0x12000, scoped, tag = 'internal scratch']
  %s0 = inlined_call_operand.vmem [shape: f32[2,128], index: 0, kind: input, shape index: {}]
  %s1 = inlined_call_operand.vmem [shape: f32[128,128], index: 1, kind: input, shape index: {}]
  %s2 = inlined_call_operand.vmem [shape: f32[1,128], index: 2, kind: input, shape index: {}]
  %s3 = inlined_call_operand.vmem [shape: f32[128,128], index: 3, kind: input, shape index: {}]
  %s4 = inlined_call_operand.vmem [shape: f32[1,128], index: 4, kind: input, shape index: {}]
  %s5 = inlined_call_operand.vmem [shape: f32[128,4], index: 5, kind: input, shape index: {}]
  %s6 = inlined_call_operand.vmem [shape: f32[1,4], index: 6, kind: input, shape index: {}]
  %s7 = inlined_call_operand.vmem [shape: f32[2,4], index: 7, kind: output, shape index: {}]
  %s8 = sld [smem:[#allocation0]]
  $region38: #{mlp_critic_forward.1} parent=0
    _
  %s10 = ssub.s32 1, %s8
  %s11 = scalar_select 0, %s10, %s8
  // Predicated region
  $region2: #{mlp_critic_forward.1} parent=0 // pred_check
    _
  $region3: #{mlp_critic_forward.1} parent=0 // pred_check_branch
    %13 = sbr.rel (0) target = $region5
  $region4: #{mlp_critic_forward.1} parent=0 // pred_region
    _
  $region5: #{mlp_critic_forward.1} parent=0 // pred_fallthru
    _
  // Predicated region
  $region6: #{mlp_critic_forward.1} parent=0 // pred_check
    _
  $region7: #{mlp_critic_forward.1} parent=0 // pred_check_branch
    %15 = sbr.rel (0) target = $region9
  $region8: #{mlp_critic_forward.1} parent=0 // pred_region
    _
  $region9: #{mlp_critic_forward.1} parent=0 // pred_fallthru
    _
  // Predicated region
  $region10: #{mlp_critic_forward.1} parent=0 // pred_check
    _
  $region11: #{mlp_critic_forward.1} parent=0 // pred_check_branch
    %17 = sbr.rel (0) target = $region13
  $region12: #{mlp_critic_forward.1} parent=0 // pred_region
    _
  $region13: #{mlp_critic_forward.1} parent=0 // pred_fallthru
    _
  // Predicated region
  $region14: #{mlp_critic_forward.1} parent=0 // pred_check
    _
  $region15: #{mlp_critic_forward.1} parent=0 // pred_check_branch
    %19 = sbr.rel (0) target = $region17
  $region16: #{mlp_critic_forward.1} parent=0 // pred_region
    _
  $region17: #{mlp_critic_forward.1} parent=0 // pred_fallthru
    _
  // Predicated region
  $region18: #{mlp_critic_forward.1} parent=0 // pred_check
    _
  $region19: #{mlp_critic_forward.1} parent=0 // pred_check_branch
    %21 = sbr.rel (0) target = $region21
  $region20: #{mlp_critic_forward.1} parent=0 // pred_region
    _
  $region21: #{mlp_critic_forward.1} parent=0 // pred_fallthru
    _
  // Predicated region
  $region22: #{mlp_critic_forward.1} parent=0 // pred_check
    _
  $region23: #{mlp_critic_forward.1} parent=0 // pred_check_branch
    %23 = sbr.rel (0) target = $region25
  $region24: #{mlp_critic_forward.1} parent=0 // pred_region
    _
  $region25: #{mlp_critic_forward.1} parent=0 // pred_fallthru
    _
  // Predicated region
  $region26: #{mlp_critic_forward.1} parent=0 // pred_check
    _
  $region27: #{mlp_critic_forward.1} parent=0 // pred_check_branch
    %25 = sbr.rel (0) target = $region29
  $region28: #{mlp_critic_forward.1} parent=0 // pred_region
    _
  $region29: #{mlp_critic_forward.1} parent=0 // pred_fallthru
    _
  %v26 = vld [vmem:[%s0] sm:$0x3]
  %v27 = vld [vmem:[%s1] sm:$0xff]
  %v28 = vld [vmem:[%s1 + $0x8] sm:$0xff]
  %v29 = vld [vmem:[%s1 + $0x10] sm:$0xff]
  %v30 = vld [vmem:[%s1 + $0x18] sm:$0xff]
  %v31 = vld [vmem:[%s1 + $0x20] sm:$0xff]
  %v32 = vld [vmem:[%s1 + $0x28] sm:$0xff]
  %v33 = vld [vmem:[%s1 + $0x30] sm:$0xff]
  %v34 = vld [vmem:[%s1 + $0x38] sm:$0xff]
  %v35 = vld [vmem:[%s1 + $0x40] sm:$0xff]
  %v36 = vld [vmem:[%s1 + $0x48] sm:$0xff]
  %v37 = vld [vmem:[%s1 + $0x50] sm:$0xff]
  %v38 = vld [vmem:[%s1 + $0x58] sm:$0xff]
  %v39 = vld [vmem:[%s1 + $0x60] sm:$0xff]
  %v40 = vld [vmem:[%s1 + $0x68] sm:$0xff]
  %v41 = vld [vmem:[%s1 + $0x70] sm:$0xff]
  %v42 = vld [vmem:[%s1 + $0x78] sm:$0xff]
  %v43 = vld [vmem:[%s2] sm:$0x1]
  %v45 = vlaneseq
  %v46 = vshrl.u32 %v45, 7
  %v47 = vsub.s32 0, %v46
  %v48 = vrot.slane %v43, %v47
  %50 = vmatprep.subr.mxu0 0.0
  %51 = vmatpush1.msra.mxu0 %v27
  %52 = vmatprep.subr.mxu0 0.0
  %53 = vmatpush1.msra.mxu0 %v28
  %54 = vmatprep.subr.mxu0 0.0
  %55 = vmatpush1.msra.mxu0 %v29
  %56 = vmatprep.subr.mxu0 0.0
  %57 = vmatpush1.msra.mxu0 %v30
  %58 = vmatprep.subr.mxu0 0.0
  %59 = vmatpush1.msra.mxu0 %v31
  %60 = vmatprep.subr.mxu0 0.0
  %61 = vmatpush1.msra.mxu0 %v32
  %62 = vmatprep.subr.mxu0 0.0
  %63 = vmatpush1.msra.mxu0 %v33
  %64 = vmatprep.subr.mxu0 0.0
  %65 = vmatpush1.msra.mxu0 %v34
  %66 = vmatprep.subr.mxu0 0.0
  %67 = vmatpush1.msra.mxu0 %v35
  %68 = vmatprep.subr.mxu0 0.0
  %69 = vmatpush1.msra.mxu0 %v36
  %70 = vmatprep.subr.mxu0 0.0
  %71 = vmatpush1.msra.mxu0 %v37
  %72 = vmatprep.subr.mxu0 0.0
  %73 = vmatpush1.msra.mxu0 %v38
  %74 = vmatprep.subr.mxu0 0.0
  %75 = vmatpush1.msra.mxu0 %v39
  %76 = vmatprep.subr.mxu0 0.0
  %77 = vmatpush1.msra.mxu0 %v40
  %78 = vmatprep.subr.mxu0 0.0
  %79 = vmatpush1.msra.mxu0 %v41
  %80 = vmatprep.subr.mxu0 0.0
  %81 = vmatpush1.msra.mxu0 %v42
  %82 = vmatprep.subr.mxu0 0.0
  %83 = vmatpush1.msra.mxu0 0.0
  %84 = vmatprep.subr.mxu0 0.0
  %85 = vmatpush1.msra.mxu0 0.0
  %86 = vmatprep.subr.mxu0 0.0
  %87 = vmatpush1.msra.mxu0 0.0
  %88 = vmatprep.subr.mxu0 0.0
  %89 = vmatpush1.msra.mxu0 0.0
  %90 = vmatprep.subr.mxu0 0.0
  %91 = vmatpush1.msra.mxu0 0.0
  %92 = vmatprep.subr.mxu0 0.0
  %93 = vmatpush1.msra.mxu0 0.0
  %94 = vmatprep.subr.mxu0 0.0
  %95 = vmatpush1.msra.mxu0 0.0
  %96 = vmatprep.subr.mxu0 0.0
  %97 = vmatpush1.msra.mxu0 0.0
  %98 = vmatprep.subr.mxu0 0.0
  %99 = vmatpush1.msra.mxu0 0.0
  %100 = vmatprep.subr.mxu0 0.0
  %101 = vmatpush1.msra.mxu0 0.0
  %102 = vmatprep.subr.mxu0 0.0
  %103 = vmatpush1.msra.mxu0 0.0
  %104 = vmatprep.subr.mxu0 0.0
  %105 = vmatpush1.msra.mxu0 0.0
  %106 = vmatprep.subr.mxu0 0.0
  %107 = vmatpush1.msra.mxu0 0.0
  %108 = vmatprep.subr.mxu0 0.0
  %109 = vmatpush1.msra.mxu0 0.0
  %110 = vmatprep.subr.mxu0 0.0
  %111 = vmatpush1.msra.mxu0 0.0
  %112 = vmatprep.subr.mxu0 0.0
  %113 = vmatpush1.msra.mxu0 0.0
  %114 = vmatprep.mubr.f32.mxu0 0.0
  %115 = vmatmul.mubr.f32.gmra.mrb[0].mxu0 %v26
  %v116 = vpop.f32.mrb[0].mxu0
  %v117 = vadd.f32 %v48, %v116
  %v118 = vpop.f32.mrb[0].mxu0
  %119 = vdwg.mxu0
  %v120 = vtanh.pop %v117
  %v121 = vld [vmem:[%s3] sm:$0xff]
  %v122 = vld [vmem:[%s3 + $0x8] sm:$0xff]
  %v123 = vld [vmem:[%s3 + $0x10] sm:$0xff]
  %v124 = vld [vmem:[%s3 + $0x18] sm:$0xff]
  %v125 = vld [vmem:[%s3 + $0x20] sm:$0xff]
  %v126 = vld [vmem:[%s3 + $0x28] sm:$0xff]
  %v127 = vld [vmem:[%s3 + $0x30] sm:$0xff]
  %v128 = vld [vmem:[%s3 + $0x38] sm:$0xff]
  %v129 = vld [vmem:[%s3 + $0x40] sm:$0xff]
  %v130 = vld [vmem:[%s3 + $0x48] sm:$0xff]
  %v131 = vld [vmem:[%s3 + $0x50] sm:$0xff]
  %v132 = vld [vmem:[%s3 + $0x58] sm:$0xff]
  %v133 = vld [vmem:[%s3 + $0x60] sm:$0xff]
  %v134 = vld [vmem:[%s3 + $0x68] sm:$0xff]
  %v135 = vld [vmem:[%s3 + $0x70] sm:$0xff]
  %v136 = vld [vmem:[%s3 + $0x78] sm:$0xff]
  %v137 = vld [vmem:[%s4] sm:$0x1]
  %v139 = vlaneseq
  %v140 = vshrl.u32 %v139, 7
  %v141 = vsub.s32 0, %v140
  %v142 = vrot.slane %v137, %v141
  %144 = vmatprep.subr.mxu0 0.0
  %145 = vmatpush1.msra.mxu0 %v121
  %146 = vmatprep.subr.mxu0 0.0
  %147 = vmatpush1.msra.mxu0 %v122
  %148 = vmatprep.subr.mxu0 0.0
  %149 = vmatpush1.msra.mxu0 %v123
  %150 = vmatprep.subr.mxu0 0.0
  %151 = vmatpush1.msra.mxu0 %v124
  %152 = vmatprep.subr.mxu0 0.0
  %153 = vmatpush1.msra.mxu0 %v125
  %154 = vmatprep.subr.mxu0 0.0
  %155 = vmatpush1.msra.mxu0 %v126
  %156 = vmatprep.subr.mxu0 0.0
  %157 = vmatpush1.msra.mxu0 %v127
  %158 = vmatprep.subr.mxu0 0.0
  %159 = vmatpush1.msra.mxu0 %v128
  %160 = vmatprep.subr.mxu0 0.0
  %161 = vmatpush1.msra.mxu0 %v129
  %162 = vmatprep.subr.mxu0 0.0
  %163 = vmatpush1.msra.mxu0 %v130
  %164 = vmatprep.subr.mxu0 0.0
  %165 = vmatpush1.msra.mxu0 %v131
  %166 = vmatprep.subr.mxu0 0.0
  %167 = vmatpush1.msra.mxu0 %v132
  %168 = vmatprep.subr.mxu0 0.0
  %169 = vmatpush1.msra.mxu0 %v133
  %170 = vmatprep.subr.mxu0 0.0
  %171 = vmatpush1.msra.mxu0 %v134
  %172 = vmatprep.subr.mxu0 0.0
  %173 = vmatpush1.msra.mxu0 %v135
  %174 = vmatprep.subr.mxu0 0.0
  %175 = vmatpush1.msra.mxu0 %v136
  %176 = vmatprep.subr.mxu0 0.0
  %177 = vmatpush1.msra.mxu0 0.0
  %178 = vmatprep.subr.mxu0 0.0
  %179 = vmatpush1.msra.mxu0 0.0
  %180 = vmatprep.subr.mxu0 0.0
  %181 = vmatpush1.msra.mxu0 0.0
  %182 = vmatprep.subr.mxu0 0.0
  %183 = vmatpush1.msra.mxu0 0.0
  %184 = vmatprep.subr.mxu0 0.0
  %185 = vmatpush1.msra.mxu0 0.0
  %186 = vmatprep.subr.mxu0 0.0
  %187 = vmatpush1.msra.mxu0 0.0
  %188 = vmatprep.subr.mxu0 0.0
  %189 = vmatpush1.msra.mxu0 0.0
  %190 = vmatprep.subr.mxu0 0.0
  %191 = vmatpush1.msra.mxu0 0.0
  %192 = vmatprep.subr.mxu0 0.0
  %193 = vmatpush1.msra.mxu0 0.0
  %194 = vmatprep.subr.mxu0 0.0
  %195 = vmatpush1.msra.mxu0 0.0
  %196 = vmatprep.subr.mxu0 0.0
  %197 = vmatpush1.msra.mxu0 0.0
  %198 = vmatprep.subr.mxu0 0.0
  %199 = vmatpush1.msra.mxu0 0.0
  %200 = vmatprep.subr.mxu0 0.0
  %201 = vmatpush1.msra.mxu0 0.0
  %202 = vmatprep.subr.mxu0 0.0
  %203 = vmatpush1.msra.mxu0 0.0
  %204 = vmatprep.subr.mxu0 0.0
  %205 = vmatpush1.msra.mxu0 0.0
  %206 = vmatprep.subr.mxu0 0.0
  %207 = vmatpush1.msra.mxu0 0.0
  %208 = vmatprep.mubr.f32.mxu0 0.0
  %209 = vmatmul.mubr.f32.gmra.mrb[0].mxu0 %v120
  %v210 = vpop.f32.mrb[0].mxu0
  %v211 = vadd.f32 %v142, %v210
  %v212 = vpop.f32.mrb[0].mxu0
  %213 = vdwg.mxu0
  %v214 = vtanh.pop %v211
  %v215 = vld [vmem:[%s5] sm:$0xff]
  %v216 = vld [vmem:[%s5 + $0x8] sm:$0xff]
  %v217 = vld [vmem:[%s5 + $0x10] sm:$0xff]
  %v218 = vld [vmem:[%s5 + $0x18] sm:$0xff]
  %v219 = vld [vmem:[%s5 + $0x20] sm:$0xff]
  %v220 = vld [vmem:[%s5 + $0x28] sm:$0xff]
  %v221 = vld [vmem:[%s5 + $0x30] sm:$0xff]
  %v222 = vld [vmem:[%s5 + $0x38] sm:$0xff]
  %v223 = vld [vmem:[%s5 + $0x40] sm:$0xff]
  %v224 = vld [vmem:[%s5 + $0x48] sm:$0xff]
  %v225 = vld [vmem:[%s5 + $0x50] sm:$0xff]
  %v226 = vld [vmem:[%s5 + $0x58] sm:$0xff]
  %v227 = vld [vmem:[%s5 + $0x60] sm:$0xff]
  %v228 = vld [vmem:[%s5 + $0x68] sm:$0xff]
  %v229 = vld [vmem:[%s5 + $0x70] sm:$0xff]
  %v230 = vld [vmem:[%s5 + $0x78] sm:$0xff]
  %v231 = vld [vmem:[%s6] sm:$0x1]
  %v233 = vlaneseq
  %v234 = vshrl.u32 %v233, 7
  %v235 = vsub.s32 0, %v234
  %v236 = vrot.slane %v231, %v235
  %238 = vmatprep.subr.mxu0 0.0
  %239 = vmatpush1.msra.mxu0 %v215
  %240 = vmatprep.subr.mxu0 0.0
  %241 = vmatpush1.msra.mxu0 %v216
  %242 = vmatprep.subr.mxu0 0.0
  %243 = vmatpush1.msra.mxu0 %v217
  %244 = vmatprep.subr.mxu0 0.0
  %245 = vmatpush1.msra.mxu0 %v218
  %246 = vmatprep.subr.mxu0 0.0
  %247 = vmatpush1.msra.mxu0 %v219
  %248 = vmatprep.subr.mxu0 0.0
  %249 = vmatpush1.msra.mxu0 %v220
  %250 = vmatprep.subr.mxu0 0.0
  %251 = vmatpush1.msra.mxu0 %v221
  %252 = vmatprep.subr.mxu0 0.0
  %253 = vmatpush1.msra.mxu0 %v222
  %254 = vmatprep.subr.mxu0 0.0
  %255 = vmatpush1.msra.mxu0 %v223
  %256 = vmatprep.subr.mxu0 0.0
  %257 = vmatpush1.msra.mxu0 %v224
  %258 = vmatprep.subr.mxu0 0.0
  %259 = vmatpush1.msra.mxu0 %v225
  %260 = vmatprep.subr.mxu0 0.0
  %261 = vmatpush1.msra.mxu0 %v226
  %262 = vmatprep.subr.mxu0 0.0
  %263 = vmatpush1.msra.mxu0 %v227
  %264 = vmatprep.subr.mxu0 0.0
  %265 = vmatpush1.msra.mxu0 %v228
  %266 = vmatprep.subr.mxu0 0.0
  %267 = vmatpush1.msra.mxu0 %v229
  %268 = vmatprep.subr.mxu0 0.0
  %269 = vmatpush1.msra.mxu0 %v230
  %270 = vmatprep.subr.mxu0 0.0
  %271 = vmatpush1.msra.mxu0 0.0
  %272 = vmatprep.subr.mxu0 0.0
  %273 = vmatpush1.msra.mxu0 0.0
  %274 = vmatprep.subr.mxu0 0.0
  %275 = vmatpush1.msra.mxu0 0.0
  %276 = vmatprep.subr.mxu0 0.0
  %277 = vmatpush1.msra.mxu0 0.0
  %278 = vmatprep.subr.mxu0 0.0
  %279 = vmatpush1.msra.mxu0 0.0
  %280 = vmatprep.subr.mxu0 0.0
  %281 = vmatpush1.msra.mxu0 0.0
  %282 = vmatprep.subr.mxu0 0.0
  %283 = vmatpush1.msra.mxu0 0.0
  %284 = vmatprep.subr.mxu0 0.0
  %285 = vmatpush1.msra.mxu0 0.0
  %286 = vmatprep.subr.mxu0 0.0
  %287 = vmatpush1.msra.mxu0 0.0
  %288 = vmatprep.subr.mxu0 0.0
  %289 = vmatpush1.msra.mxu0 0.0
  %290 = vmatprep.subr.mxu0 0.0
  %291 = vmatpush1.msra.mxu0 0.0
  %292 = vmatprep.subr.mxu0 0.0
  %293 = vmatpush1.msra.mxu0 0.0
  %294 = vmatprep.subr.mxu0 0.0
  %295 = vmatpush1.msra.mxu0 0.0
  %296 = vmatprep.subr.mxu0 0.0
  %297 = vmatpush1.msra.mxu0 0.0
  %298 = vmatprep.subr.mxu0 0.0
  %299 = vmatpush1.msra.mxu0 0.0
  %300 = vmatprep.subr.mxu0 0.0
  %301 = vmatpush1.msra.mxu0 0.0
  %302 = vmatprep.mubr.f32.mxu0 0.0
  %303 = vmatmul.mubr.f32.gmra.mrb[0].mxu0 %v214
  %v304 = vpop.f32.mrb[0].mxu0
  %v305 = vadd.f32 %v236, %v304
  %v306 = vpop.f32.mrb[0].mxu0
  %307 = vdwg.mxu0
  %vm308 = vcmask 25600
  %309 = vst.msk [vmem:[%s7] sm:$0x3] %vm308, %v305
  // Predicated region
  $region30: #{mlp_critic_forward.1} parent=0 // pred_check
    _
  $region31: #{mlp_critic_forward.1} parent=0 // pred_check_branch
    %311 = sbr.rel (0) target = $region33
  $region32: #{mlp_critic_forward.1} parent=0 // pred_region
    _
  $region33: #{mlp_critic_forward.1} parent=0 // pred_fallthru
    _
  // Predicated region
  $region34: #{mlp_critic_forward.1} parent=0 // pred_check
    _
  $region35: #{mlp_critic_forward.1} parent=0 // pred_check_branch
    %313 = sbr.rel (0) target = $region37
  $region36: #{mlp_critic_forward.1} parent=0 // pred_region
    _
  $region37: #{mlp_critic_forward.1} parent=0 // pred_fallthru
    _

</llo_original>
